<compile_context>
chip_gen: v6e
topology: v6e:2x2x1
jax: 0.10.0
libtpu: 0.0.40
codegen_flags: <defaults>
</compile_context>

<pallas_src>
import jax
import jax.numpy as jnp
from jax import lax
from jax.experimental import pallas as pl
from jax.experimental.pallas import tpu as pltpu

# ---- small deterministic shapes consistent with the module ----
B        = 2           # batch
C, H, W  = 3, 16, 16   # image (NCHW in the PyTorch reference; unused by the logits)
META_IN  = 8           # args.use_metadata_num
META_HID = 16          # args.metadata_dim
NUM_FEAT = 32          # encoder.num_features (EVA head width stand-in)
NUM_CLS  = 4           # args.num_classes
LN_EPS   = 1e-5        # PyTorch LayerNorm default

# ---- packed parameter slab layout (row offsets multiples of 8, lane-dense) ----
R_WIP  = 0                      # input_proj weight                      [8, 16]
R_WVO  = R_WIP + META_IN        # folded diag(g1) @ W_v @ W_o            [16, 16]
R_WOP  = R_WVO + META_HID       # output_proj weight                     [16, 32]
R_WFC  = R_WOP + META_HID       # folded diag(gf) @ W_fv @ W_fo @ W_cls  [32, 4]
R_BIAS = R_WFC + NUM_FEAT       # 4 bias rows (b_ip, b_vo, b_op, b_fc)
SLAB_ROWS = R_BIAS + 8          # = 80
SLAB_COLS = 128                 # lane-dense rows (512 B) for unmasked DMA


def _normalize(x):
    """LayerNorm without affine (affines folded offline into downstream linears).

    Variance via E[x^2] - mu^2 so the two cross-lane reductions are independent.
    """
    mu = jnp.mean(x, axis=-1, keepdims=True)
    ex2 = jnp.mean(x * x, axis=-1, keepdims=True)
    var = ex2 - mu * mu
    return (x - mu) * lax.rsqrt(var + LN_EPS)


def eva_head_kernel(meta_ref, p_ref, out_ref):
    f32 = jnp.float32

    # Ref-view slices: each one is a targeted vld that feeds a dot operand;
    # the full [80,128] slab is never materialized in vregs.
    w_ip = p_ref[R_WIP:R_WIP + META_IN,  :META_HID]          # [8, 16]
    w_vo = p_ref[R_WVO:R_WVO + META_HID, :META_HID]          # [16, 16]
    w_op = p_ref[R_WOP:R_WOP + META_HID, :NUM_FEAT]          # [16, 32]
    w_fc = p_ref[R_WFC:R_WFC + NUM_FEAT, :NUM_CLS]           # [32, 4]

    b_ip = p_ref[R_BIAS + 0:R_BIAS + 1, :META_HID]           # input_proj bias
    b_vo = p_ref[R_BIAS + 1:R_BIAS + 2, :META_HID]           # folded bt1@Wvo + b_v@W_o + b_o
    b_op = p_ref[R_BIAS + 2:R_BIAS + 3, :NUM_FEAT]           # output_proj bias
    b_fc = p_ref[R_BIAS + 3:R_BIAS + 4, :NUM_CLS]            # folded btf@Wfc + fusion/cls bias

    meta = meta_ref[...]                                     # [B_pad, 8]

    # --- MultiheadAttentionMetadataEncoder (num_layers=1, seq_len=1) -----
    x = jnp.dot(meta, w_ip, preferred_element_type=f32) + b_ip           # input_proj
    residual = x
    xn = _normalize(x)                                                   # pre-norm (affine folded)
    # Self-MHA over a length-1 sequence: softmax over one key is exactly 1,
    # so attn_out == out_proj(V(xn)); diag(g1)@W_v@W_o folded offline.
    x = residual + jnp.dot(xn, w_vo, preferred_element_type=f32) + b_vo  # dropout == id (eval)
    x = jnp.dot(x, w_op, preferred_element_type=f32) + b_op              # output_proj
    mfeat = _normalize(x)                                                # final_norm (affine folded)

    # --- AttentionFusion (singleton softmax == 1) + classifier -----------
    # fused == fusion_out_proj(fusion_V(metadata_features)); eval-mode mean of
    # 5x (Dropout -> linear_main) == one linear_main.  diag(gf)@W_fv@W_fo@W_cls
    # folded offline into one [32, NUM_CLS] weight.
    out_ref[...] = jnp.dot(mfeat, w_fc, preferred_element_type=f32) + b_fc


def init_params(key):
    """Deterministic PyTorch-style (uniform +-1/sqrt(fan_in)) init of the live layers."""
    def linear(k, fan_in, fan_out):
        kw, kb = jax.random.split(k)
        bound = 1.0 / float(fan_in) ** 0.5
        w = jax.random.uniform(kw, (fan_in, fan_out), jnp.float32, -bound, bound)
        b = jax.random.uniform(kb, (1, fan_out), jnp.float32, -bound, bound)
        return w, b

    ks = jax.random.split(key, 7)
    p = {}
    p['w_ip'],  p['b_ip']  = linear(ks[0], META_IN, META_HID)     # input_proj
    p['g1']  = jnp.ones((1, META_HID), jnp.float32)               # norm_layers[0]
    p['bt1'] = jnp.zeros((1, META_HID), jnp.float32)
    p['w_v'],  p['b_v']  = linear(ks[1], META_HID, META_HID)      # MHA V proj
    p['w_o'],  p['b_o']  = linear(ks[2], META_HID, META_HID)      # MHA out_proj
    p['w_op'], p['b_op'] = linear(ks[3], META_HID, NUM_FEAT)      # output_proj
    p['gf']  = jnp.ones((1, NUM_FEAT), jnp.float32)               # final_norm
    p['btf'] = jnp.zeros((1, NUM_FEAT), jnp.float32)
    p['w_fv'], p['b_fv'] = linear(ks[4], NUM_FEAT, NUM_FEAT)      # fusion V proj
    p['w_fo'], p['b_fo'] = linear(ks[5], NUM_FEAT, NUM_FEAT)      # fusion out_proj
    p['w_cls'], p['b_cls'] = linear(ks[6], NUM_FEAT, NUM_CLS)     # linear_main
    return p


def pack_params(p):
    """Fold eval-mode linear chains + LN affines, pack into one [80,128] f32 slab."""
    # MHA-V -> out_proj fold, then fold the pre-norm LN affine (g1, bt1):
    #   (norm*g1 + bt1) @ Wvo + bvo == norm @ (diag(g1)@Wvo) + (bt1@Wvo + bvo)
    w_vo = p['w_v'] @ p['w_o']                                        # [16,16]
    b_vo = p['b_v'] @ p['w_o'] + p['b_o']                             # [1,16]
    w_vo_f = p['g1'][0][:, None] * w_vo
    b_vo_f = p['bt1'] @ w_vo + b_vo

    # fusion-V -> fusion-out -> classifier fold, then fold final_norm affine.
    w_fc = p['w_fv'] @ p['w_fo'] @ p['w_cls']                         # [32,4]
    b_fc = (p['b_fv'] @ p['w_fo'] + p['b_fo']) @ p['w_cls'] + p['b_cls']
    w_fc_f = p['gf'][0][:, None] * w_fc
    b_fc_f = p['btf'] @ w_fc + b_fc

    slab = jnp.zeros((SLAB_ROWS, SLAB_COLS), jnp.float32)
    slab = slab.at[R_WIP:R_WIP + META_IN,  :META_HID].set(p['w_ip'])
    slab = slab.at[R_WVO:R_WVO + META_HID, :META_HID].set(w_vo_f)
    slab = slab.at[R_WOP:R_WOP + META_HID, :NUM_FEAT].set(p['w_op'])
    slab = slab.at[R_WFC:R_WFC + NUM_FEAT, :NUM_CLS].set(w_fc_f)
    slab = slab.at[R_BIAS + 0, :META_HID].set(p['b_ip'][0])
    slab = slab.at[R_BIAS + 1, :META_HID].set(b_vo_f[0])
    slab = slab.at[R_BIAS + 2, :NUM_FEAT].set(p['b_op'][0])
    slab = slab.at[R_BIAS + 3, :NUM_CLS].set(b_fc_f[0])
    return slab


@jax.jit
def custom_model_eva_forward(images, metadata, packed_params):
    # TODO(synk): the timm EVA backbone is not implemented; under
    # fusion_method='attention' with a length-1 key/value sequence the softmax
    # weight is identically 1, so the logits do not depend on image_features.
    del images
    meta = metadata.astype(jnp.float32)
    b = meta.shape[0]
    b_pad = ((b + 7) // 8) * 8          # sublane-aligned batch; padded rows dropped after
    if b_pad != b:
        meta = jnp.pad(meta, ((0, b_pad - b), (0, 0)))
    out = pl.pallas_call(
        eva_head_kernel,
        out_shape=jax.ShapeDtypeStruct((b_pad, NUM_CLS), jnp.float32),
        # Everything is tiny (~42 KiB total); keep whole arrays resident in VMEM, no grid.
        in_specs=[pl.BlockSpec(memory_space=pltpu.MemorySpace.VMEM)] * 2,
        out_specs=pl.BlockSpec(memory_space=pltpu.MemorySpace.VMEM),
    )(meta, packed_params)
    return out[:b]


if __name__ == "__main__":
    key = jax.random.PRNGKey(0)
    k_img, k_meta, k_par = jax.random.split(key, 3)
    images = jax.random.normal(k_img, (B, C, H, W), jnp.float32)
    metadata = jax.random.normal(k_meta, (B, META_IN), jnp.float32)
    params = init_params(k_par)
    packed = pack_params(params)   # offline fold + pack, done once

    out = custom_model_eva_forward(images, metadata, packed)
    jax.block_until_ready(out)
    assert out.shape == (B, NUM_CLS) and out.dtype == jnp.float32
    print("KERNEL_OK")
</pallas_src>

<mosaic_0001>
module attributes {stable_mosaic.version = 11 : i64} {
  func.func @eva_head_kernel(%arg0: memref<8x8xf32, #tpu.memory_space<vmem>>, %arg1: memref<80x128xf32, #tpu.memory_space<vmem>>, %arg2: memref<8x4xf32, #tpu.memory_space<vmem>>) attributes {dimension_semantics = [], scalar_prefetch = 0 : i64, scratch_operands = 0 : i64, tpu.core_type = #tpu.core_type<tc>} {
    %c0 = arith.constant 0 : index
    %c0_0 = arith.constant 0 : index
    %0 = vector.load %arg1[%c0, %c0_0] : memref<80x128xf32, #tpu.memory_space<vmem>>, vector<8x16xf32>
    %c8 = arith.constant 8 : index
    %c0_1 = arith.constant 0 : index
    %1 = vector.load %arg1[%c8, %c0_1] : memref<80x128xf32, #tpu.memory_space<vmem>>, vector<16x16xf32>
    %c24 = arith.constant 24 : index
    %c0_2 = arith.constant 0 : index
    %2 = vector.load %arg1[%c24, %c0_2] : memref<80x128xf32, #tpu.memory_space<vmem>>, vector<16x32xf32>
    %c40 = arith.constant 40 : index
    %c0_3 = arith.constant 0 : index
    %3 = vector.load %arg1[%c40, %c0_3] : memref<80x128xf32, #tpu.memory_space<vmem>>, vector<32x4xf32>
    %c72 = arith.constant 72 : index
    %c0_4 = arith.constant 0 : index
    %4 = vector.load %arg1[%c72, %c0_4] : memref<80x128xf32, #tpu.memory_space<vmem>>, vector<1x16xf32>
    %c73 = arith.constant 73 : index
    %c0_5 = arith.constant 0 : index
    %5 = vector.load %arg1[%c73, %c0_5] : memref<80x128xf32, #tpu.memory_space<vmem>>, vector<1x16xf32>
    %c74 = arith.constant 74 : index
    %c0_6 = arith.constant 0 : index
    %6 = vector.load %arg1[%c74, %c0_6] : memref<80x128xf32, #tpu.memory_space<vmem>>, vector<1x32xf32>
    %c75 = arith.constant 75 : index
    %c0_7 = arith.constant 0 : index
    %7 = vector.load %arg1[%c75, %c0_7] : memref<80x128xf32, #tpu.memory_space<vmem>>, vector<1x4xf32>
    %c0_8 = arith.constant 0 : index
    %c0_9 = arith.constant 0 : index
    %8 = vector.load %arg0[%c0_8, %c0_9] : memref<8x8xf32, #tpu.memory_space<vmem>>, vector<8x8xf32>
    %cst = arith.constant dense<0.000000e+00> : vector<8x16xf32>
    %9 = tpu.matmul %8, %0, %cst {dimension_numbers = #tpu.dot_dimension_numbers<[1], [0], [0], [1], [0, 0, 1, 1], [], []>} : vector<8x8xf32>, vector<8x16xf32>, vector<8x16xf32> -> vector<8x16xf32>
    %10 = vector.broadcast %4 : vector<1x16xf32> to vector<8x16xf32>
    %11 = arith.addf %9, %10 : vector<8x16xf32>
    %cst_10 = arith.constant dense<0.000000e+00> : vector<8xf32>
    %12 = vector.multi_reduction <add>, %11, %cst_10 [1] : vector<8x16xf32> to vector<8xf32>
    %13 = vector.shape_cast %12 : vector<8xf32> to vector<8x1xf32>
    %cst_11 = arith.constant 1.600000e+01 : f32
    %14 = vector.broadcast %cst_11 : f32 to vector<8x1xf32>
    %15 = arith.divf %13, %14 : vector<8x1xf32>
    %16 = arith.mulf %11, %11 : vector<8x16xf32>
    %cst_12 = arith.constant dense<0.000000e+00> : vector<8xf32>
    %17 = vector.multi_reduction <add>, %16, %cst_12 [1] : vector<8x16xf32> to vector<8xf32>
    %18 = vector.shape_cast %17 : vector<8xf32> to vector<8x1xf32>
    %cst_13 = arith.constant 1.600000e+01 : f32
    %19 = vector.broadcast %cst_13 : f32 to vector<8x1xf32>
    %20 = arith.divf %18, %19 : vector<8x1xf32>
    %21 = arith.mulf %15, %15 : vector<8x1xf32>
    %22 = arith.subf %20, %21 : vector<8x1xf32>
    %23 = vector.broadcast %15 : vector<8x1xf32> to vector<8x16xf32>
    %24 = arith.subf %11, %23 : vector<8x16xf32>
    %cst_14 = arith.constant 9.99999974E-6 : f32
    %25 = vector.broadcast %cst_14 : f32 to vector<8x1xf32>
    %26 = arith.addf %22, %25 : vector<8x1xf32>
    %27 = math.rsqrt %26 : vector<8x1xf32>
    %28 = vector.broadcast %27 : vector<8x1xf32> to vector<8x16xf32>
    %29 = arith.mulf %24, %28 : vector<8x16xf32>
    %cst_15 = arith.constant dense<0.000000e+00> : vector<8x16xf32>
    %30 = tpu.matmul %29, %1, %cst_15 {dimension_numbers = #tpu.dot_dimension_numbers<[1], [0], [0], [1], [0, 0, 1, 1], [], []>} : vector<8x16xf32>, vector<16x16xf32>, vector<8x16xf32> -> vector<8x16xf32>
    %31 = arith.addf %11, %30 : vector<8x16xf32>
    %32 = vector.broadcast %5 : vector<1x16xf32> to vector<8x16xf32>
    %33 = arith.addf %31, %32 : vector<8x16xf32>
    %cst_16 = arith.constant dense<0.000000e+00> : vector<8x32xf32>
    %34 = tpu.matmul %33, %2, %cst_16 {dimension_numbers = #tpu.dot_dimension_numbers<[1], [0], [0], [1], [0, 0, 1, 1], [], []>} : vector<8x16xf32>, vector<16x32xf32>, vector<8x32xf32> -> vector<8x32xf32>
    %35 = vector.broadcast %6 : vector<1x32xf32> to vector<8x32xf32>
    %36 = arith.addf %34, %35 : vector<8x32xf32>
    %cst_17 = arith.constant dense<0.000000e+00> : vector<8xf32>
    %37 = vector.multi_reduction <add>, %36, %cst_17 [1] : vector<8x32xf32> to vector<8xf32>
    %38 = vector.shape_cast %37 : vector<8xf32> to vector<8x1xf32>
    %cst_18 = arith.constant 3.200000e+01 : f32
    %39 = vector.broadcast %cst_18 : f32 to vector<8x1xf32>
    %40 = arith.divf %38, %39 : vector<8x1xf32>
    %41 = arith.mulf %36, %36 : vector<8x32xf32>
    %cst_19 = arith.constant dense<0.000000e+00> : vector<8xf32>
    %42 = vector.multi_reduction <add>, %41, %cst_19 [1] : vector<8x32xf32> to vector<8xf32>
    %43 = vector.shape_cast %42 : vector<8xf32> to vector<8x1xf32>
    %cst_20 = arith.constant 3.200000e+01 : f32
    %44 = vector.broadcast %cst_20 : f32 to vector<8x1xf32>
    %45 = arith.divf %43, %44 : vector<8x1xf32>
    %46 = arith.mulf %40, %40 : vector<8x1xf32>
    %47 = arith.subf %45, %46 : vector<8x1xf32>
    %48 = vector.broadcast %40 : vector<8x1xf32> to vector<8x32xf32>
    %49 = arith.subf %36, %48 : vector<8x32xf32>
    %cst_21 = arith.constant 9.99999974E-6 : f32
    %50 = vector.broadcast %cst_21 : f32 to vector<8x1xf32>
    %51 = arith.addf %47, %50 : vector<8x1xf32>
    %52 = math.rsqrt %51 : vector<8x1xf32>
    %53 = vector.broadcast %52 : vector<8x1xf32> to vector<8x32xf32>
    %54 = arith.mulf %49, %53 : vector<8x32xf32>
    %cst_22 = arith.constant dense<0.000000e+00> : vector<8x4xf32>
    %55 = tpu.matmul %54, %3, %cst_22 {dimension_numbers = #tpu.dot_dimension_numbers<[1], [0], [0], [1], [0, 0, 1, 1], [], []>} : vector<8x32xf32>, vector<32x4xf32>, vector<8x4xf32> -> vector<8x4xf32>
    %56 = vector.broadcast %7 : vector<1x4xf32> to vector<8x4xf32>
    %57 = arith.addf %55, %56 : vector<8x4xf32>
    %c0_23 = arith.constant 0 : index
    %c0_24 = arith.constant 0 : index
    %58 = vector.load %arg2[%c0_23, %c0_24] : memref<8x4xf32, #tpu.memory_space<vmem>>, vector<8x4xf32>
    tpu.vector_store %arg2[%c0_23, %c0_24], %57 {strides = array<i32>} : memref<8x4xf32, #tpu.memory_space<vmem>>, vector<8x4xf32>,
    return
  }
}

</mosaic_0001>

<llo_original>
// kernel: custom_model_eva_forward.1
$region0: #{custom_model_eva_forward.1}
  #allocation0 [shape = 'u32[]', space=smem, size = 0x4, offset = 0x4, fixed_abs, tag = 'smem constant byte address 0x4 - core index']
  #allocation1 [shape = 'u32[144,128]{1,0:T(1,128)}', space=vmem, size = 0x12000, scoped, tag = 'internal scratch']
  %s0 = inlined_call_operand.vmem [shape: f32[8,8], index: 0, kind: input, shape index: {}]
  %s1 = inlined_call_operand.hbm [shape: f32[80,128], index: 1, kind: input, shape index: {}]
  %s2 = inlined_call_operand.vmem [shape: f32[8,4], index: 2, kind: output, shape index: {}]
  %s3 = sld [smem:[#allocation0]]
  $region22: #{custom_model_eva_forward.1} parent=0
    _
  %s5 = ssub.s32 1, %s3
  %s6 = scalar_select 0, %s5, %s3
  $region1: #{custom_model_eva_forward.1} parent=0
    #allocation2 [shape = 'u8[40960]{0}', space=vmem, size = 0xa000, scoped, tag = 'input window, operand 1, single buffered']
    #allocation3 [shape = 's32[1]{0}', space=sflag, size = 0x4, scoped, tag = 'scoped memory for custom_model_eva_forward.1']
    %7 = vsyncpa [#allocation3], 0
    // Predicated region
    $region2: #{custom_model_eva_forward.1} parent=1 // pred_check
      _
    $region3: #{custom_model_eva_forward.1} parent=1 // pred_check_branch
      %9 = sbr.rel (0) target = $region5
    $region4: #{custom_model_eva_forward.1} parent=1 // pred_region
      _
    $region5: #{custom_model_eva_forward.1} parent=1 // pred_fallthru
      _
    // Predicated region
    $region6: #{custom_model_eva_forward.1} parent=1 // pred_check
      _
    $region7: #{custom_model_eva_forward.1} parent=1 // pred_check_branch
      %11 = sbr.rel (0) target = $region9
    $region8: #{custom_model_eva_forward.1} parent=1 // pred_region
      %s13 = ssub.s32 1280, 1280
      %14 = vsyncadd [#allocation3], %s13
      %s15 = sshll.u32 [#allocation2], 4
      %s16 = int_to_ptr.vmem [resolvable:$true] %s15
      %21 = dma.hbm_to_vmem [thread:$0]  %s1, 1280, %s16, [#allocation3], 128, 128, 8
    $region9: #{custom_model_eva_forward.1} parent=1 // pred_fallthru
      _
    // Predicated region
    $region10: #{custom_model_eva_forward.1} parent=1 // pred_check
      _
    $region11: #{custom_model_eva_forward.1} parent=1 // pred_check_branch
      %23 = sbr.rel (0) target = $region13
    $region12: #{custom_model_eva_forward.1} parent=1 // pred_region
      %24 = dma.done [#allocation3], 1280
    $region13: #{custom_model_eva_forward.1} parent=1 // pred_fallthru
      _
    %v25 = vld [vmem:[#allocation2] sm:$0xff]
    %v26 = vld [vmem:[#allocation2 + $0x8] sm:$0xff]
    %v27 = vld [vmem:[#allocation2 + $0x10] sm:$0xff]
    %v28 = vld [vmem:[#allocation2 + $0x18] sm:$0xff]
    %v29 = vld [vmem:[#allocation2 + $0x20] sm:$0xff]
    %v30 = vld [vmem:[#allocation2 + $0x28] sm:$0xff]
    %v31 = vld [vmem:[#allocation2 + $0x30] sm:$0xff]
    %v32 = vld [vmem:[#allocation2 + $0x38] sm:$0xff]
    %v33 = vld [vmem:[#allocation2 + $0x40] sm:$0xff]
    %v34 = vld [vmem:[#allocation2 + $0x48] sm:$0x1]
    %v35 = vld [vmem:[#allocation2 + $0x49] sm:$0x1]
    %v36 = vld [vmem:[#allocation2 + $0x4a] sm:$0x1]
    %v37 = vld [vmem:[#allocation2 + $0x4b] sm:$0x1]
    %v38 = vld [vmem:[%s0] sm:$0xff]
    %v39 = vlaneseq
    %v40 = vshrl.u32 %v39, 7
    %v41 = vsub.s32 0, %v40
    %v42 = vrot.slane %v34, %v41
    %vm43 = vcmask 64512
    %v45 = vsel %vm43, %v38, 0
    %47 = vmatprep.subr.mxu0 0.0
    %48 = vmatpush1.msra.mxu0 0.0
    %49 = vmatprep.subr.mxu0 0.0
    %50 = vmatpush1.msra.mxu0 0.0
    %51 = vmatprep.subr.mxu0 0.0
    %52 = vmatpush1.msra.mxu0 0.0
    %53 = vmatprep.subr.mxu0 0.0
    %54 = vmatpush1.msra.mxu0 0.0
    %55 = vmatprep.subr.mxu0 0.0
    %56 = vmatpush1.msra.mxu0 0.0
    %57 = vmatprep.subr.mxu0 0.0
    %58 = vmatpush1.msra.mxu0 0.0
    %59 = vmatprep.subr.mxu0 0.0
    %60 = vmatpush1.msra.mxu0 0.0
    %61 = vmatprep.subr.mxu0 0.0
    %62 = vmatpush1.msra.mxu0 0.0
    %63 = vmatprep.subr.mxu0 0.0
    %64 = vmatpush1.msra.mxu0 0.0
    %65 = vmatprep.subr.mxu0 0.0
    %66 = vmatpush1.msra.mxu0 0.0
    %67 = vmatprep.subr.mxu0 0.0
    %68 = vmatpush1.msra.mxu0 0.0
    %69 = vmatprep.subr.mxu0 0.0
    %70 = vmatpush1.msra.mxu0 0.0
    %71 = vmatprep.subr.mxu0 0.0
    %72 = vmatpush1.msra.mxu0 0.0
    %73 = vmatprep.subr.mxu0 0.0
    %74 = vmatpush1.msra.mxu0 0.0
    %75 = vmatprep.subr.mxu0 0.0
    %76 = vmatpush1.msra.mxu0 0.0
    %77 = vmatprep.subr.mxu0 0.0
    %78 = vmatpush1.msra.mxu0 %v25
    %79 = vmatprep.subr.mxu0 0.0
    %80 = vmatpush2.msra.mxu0 0.0
    %81 = vmatprep.subr.mxu0 0.0
    %82 = vmatpush2.msra.mxu0 0.0
    %83 = vmatprep.subr.mxu0 0.0
    %84 = vmatpush2.msra.mxu0 0.0
    %85 = vmatprep.subr.mxu0 0.0
    %86 = vmatpush2.msra.mxu0 0.0
    %87 = vmatprep.subr.mxu0 0.0
    %88 = vmatpush2.msra.mxu0 0.0
    %89 = vmatprep.subr.mxu0 0.0
    %90 = vmatpush2.msra.mxu0 0.0
    %91 = vmatprep.subr.mxu0 0.0
    %92 = vmatpush2.msra.mxu0 0.0
    %93 = vmatprep.subr.mxu0 0.0
    %94 = vmatpush2.msra.mxu0 0.0
    %95 = vmatprep.subr.mxu0 0.0
    %96 = vmatpush2.msra.mxu0 0.0
    %97 = vmatprep.subr.mxu0 0.0
    %98 = vmatpush2.msra.mxu0 0.0
    %99 = vmatprep.subr.mxu0 0.0
    %100 = vmatpush2.msra.mxu0 0.0
    %101 = vmatprep.subr.mxu0 0.0
    %102 = vmatpush2.msra.mxu0 0.0
    %103 = vmatprep.subr.mxu0 0.0
    %104 = vmatpush2.msra.mxu0 0.0
    %105 = vmatprep.subr.mxu0 0.0
    %106 = vmatpush2.msra.mxu0 0.0
    %107 = vmatprep.subr.mxu0 0.0
    %108 = vmatpush2.msra.mxu0 0.0
    %109 = vmatprep.subr.mxu0 0.0
    %110 = vmatpush2.msra.mxu0 0.0
    %111 = vmatprep.mubr.f32.mxu0 0.0
    %112 = vmatmul.mubr.f32.gmra.mxu0 %v45
    %v113 = vpop.f32.mrf.mxu0
    %v114 = vadd.f32 %v42, %v113
    %v115 = vpop.f32.mrf.mxu0
    %116 = vdwg.mxu0
    %vm117 = vcmask 130048
    %v118 = vsel %vm117, %v114, 0.0
    %119 = vadd.xlane.f32.xlu0 %v118
    %v120 = vpop.xlane.xlu0 %119
    %v121 = vrcp.pop 16.0
    %v122 = vmul.f32 %v120, %v121
    %v123 = vmul.f32 %v114, %v114
    %v124 = vsel %vm117, %v123, 0.0
    %125 = vadd.xlane.f32.xlu0 %v124
    %v126 = vpop.xlane.xlu0 %125
    %v127 = vmul.f32 %v126, %v121
    %v128 = vmul.f32 %v122, %v122
    %v129 = vsub.f32 %v127, %v128
    %v130 = vsub.f32 %v114, %v122
    %v131 = vadd.f32 %v129, 1e-05
    %v132 = vrsqrt.pop %v131
    %v133 = vmul.f32 %v130, %v132
    %v135 = vsel %vm117, %v133, 0
    %137 = vmatprep.subr.mxu0 0.0
    %138 = vmatpush1.msra.mxu0 0.0
    %139 = vmatprep.subr.mxu0 0.0
    %140 = vmatpush1.msra.mxu0 0.0
    %141 = vmatprep.subr.mxu0 0.0
    %142 = vmatpush1.msra.mxu0 0.0
    %143 = vmatprep.subr.mxu0 0.0
    %144 = vmatpush1.msra.mxu0 0.0
    %145 = vmatprep.subr.mxu0 0.0
    %146 = vmatpush1.msra.mxu0 0.0
    %147 = vmatprep.subr.mxu0 0.0
    %148 = vmatpush1.msra.mxu0 0.0
    %149 = vmatprep.subr.mxu0 0.0
    %150 = vmatpush1.msra.mxu0 0.0
    %151 = vmatprep.subr.mxu0 0.0
    %152 = vmatpush1.msra.mxu0 0.0
    %153 = vmatprep.subr.mxu0 0.0
    %154 = vmatpush1.msra.mxu0 0.0
    %155 = vmatprep.subr.mxu0 0.0
    %156 = vmatpush1.msra.mxu0 0.0
    %157 = vmatprep.subr.mxu0 0.0
    %158 = vmatpush1.msra.mxu0 0.0
    %159 = vmatprep.subr.mxu0 0.0
    %160 = vmatpush1.msra.mxu0 0.0
    %161 = vmatprep.subr.mxu0 0.0
    %162 = vmatpush1.msra.mxu0 0.0
    %163 = vmatprep.subr.mxu0 0.0
    %164 = vmatpush1.msra.mxu0 0.0
    %165 = vmatprep.subr.mxu0 0.0
    %166 = vmatpush1.msra.mxu0 %v27
    %167 = vmatprep.subr.mxu0 0.0
    %168 = vmatpush1.msra.mxu0 %v26
    %169 = vmatprep.subr.mxu0 0.0
    %170 = vmatpush2.msra.mxu0 0.0
    %171 = vmatprep.subr.mxu0 0.0
    %172 = vmatpush2.msra.mxu0 0.0
    %173 = vmatprep.subr.mxu0 0.0
    %174 = vmatpush2.msra.mxu0 0.0
    %175 = vmatprep.subr.mxu0 0.0
    %176 = vmatpush2.msra.mxu0 0.0
    %177 = vmatprep.subr.mxu0 0.0
    %178 = vmatpush2.msra.mxu0 0.0
    %179 = vmatprep.subr.mxu0 0.0
    %180 = vmatpush2.msra.mxu0 0.0
    %181 = vmatprep.subr.mxu0 0.0
    %182 = vmatpush2.msra.mxu0 0.0
    %183 = vmatprep.subr.mxu0 0.0
    %184 = vmatpush2.msra.mxu0 0.0
    %185 = vmatprep.subr.mxu0 0.0
    %186 = vmatpush2.msra.mxu0 0.0
    %187 = vmatprep.subr.mxu0 0.0
    %188 = vmatpush2.msra.mxu0 0.0
    %189 = vmatprep.subr.mxu0 0.0
    %190 = vmatpush2.msra.mxu0 0.0
    %191 = vmatprep.subr.mxu0 0.0
    %192 = vmatpush2.msra.mxu0 0.0
    %193 = vmatprep.subr.mxu0 0.0
    %194 = vmatpush2.msra.mxu0 0.0
    %195 = vmatprep.subr.mxu0 0.0
    %196 = vmatpush2.msra.mxu0 0.0
    %197 = vmatprep.subr.mxu0 0.0
    %198 = vmatpush2.msra.mxu0 0.0
    %199 = vmatprep.subr.mxu0 0.0
    %200 = vmatpush2.msra.mxu0 0.0
    %201 = vmatprep.mubr.f32.mxu0 0.0
    %202 = vmatmul.mubr.f32.gmra.mxu0 %v135
    %v203 = vpop.f32.mrf.mxu0
    %v204 = vadd.f32 0.0, %v203
    %v205 = vpop.f32.mrf.mxu0
    %206 = vdwg.mxu0
    %v207 = vadd.f32 %v114, %v204
    %v208 = vlaneseq
    %v209 = vshrl.u32 %v208, 7
    %v210 = vsub.s32 0, %v209
    %v211 = vrot.slane %v35, %v210
    %v212 = vadd.f32 %v207, %v211
    %v213 = vlaneseq
    %v214 = vshrl.u32 %v213, 7
    %v215 = vsub.s32 0, %v214
    %v216 = vrot.slane %v36, %v215
    %v218 = vsel %vm117, %v212, 0
    %220 = vmatprep.subr.mxu0 0.0
    %221 = vmatpush1.msra.mxu0 0.0
    %222 = vmatprep.subr.mxu0 0.0
    %223 = vmatpush1.msra.mxu0 0.0
    %224 = vmatprep.subr.mxu0 0.0
    %225 = vmatpush1.msra.mxu0 0.0
    %226 = vmatprep.subr.mxu0 0.0
    %227 = vmatpush1.msra.mxu0 0.0
    %228 = vmatprep.subr.mxu0 0.0
    %229 = vmatpush1.msra.mxu0 0.0
    %230 = vmatprep.subr.mxu0 0.0
    %231 = vmatpush1.msra.mxu0 0.0
    %232 = vmatprep.subr.mxu0 0.0
    %233 = vmatpush1.msra.mxu0 0.0
    %234 = vmatprep.subr.mxu0 0.0
    %235 = vmatpush1.msra.mxu0 0.0
    %236 = vmatprep.subr.mxu0 0.0
    %237 = vmatpush1.msra.mxu0 0.0
    %238 = vmatprep.subr.mxu0 0.0
    %239 = vmatpush1.msra.mxu0 0.0
    %240 = vmatprep.subr.mxu0 0.0
    %241 = vmatpush1.msra.mxu0 0.0
    %242 = vmatprep.subr.mxu0 0.0
    %243 = vmatpush1.msra.mxu0 0.0
    %244 = vmatprep.subr.mxu0 0.0
    %245 = vmatpush1.msra.mxu0 0.0
    %246 = vmatprep.subr.mxu0 0.0
    %247 = vmatpush1.msra.mxu0 0.0
    %248 = vmatprep.subr.mxu0 0.0
    %249 = vmatpush1.msra.mxu0 %v29
    %250 = vmatprep.subr.mxu0 0.0
    %251 = vmatpush1.msra.mxu0 %v28
    %252 = vmatprep.subr.mxu0 0.0
    %253 = vmatpush2.msra.mxu0 0.0
    %254 = vmatprep.subr.mxu0 0.0
    %255 = vmatpush2.msra.mxu0 0.0
    %256 = vmatprep.subr.mxu0 0.0
    %257 = vmatpush2.msra.mxu0 0.0
    %258 = vmatprep.subr.mxu0 0.0
    %259 = vmatpush2.msra.mxu0 0.0
    %260 = vmatprep.subr.mxu0 0.0
    %261 = vmatpush2.msra.mxu0 0.0
    %262 = vmatprep.subr.mxu0 0.0
    %263 = vmatpush2.msra.mxu0 0.0
    %264 = vmatprep.subr.mxu0 0.0
    %265 = vmatpush2.msra.mxu0 0.0
    %266 = vmatprep.subr.mxu0 0.0
    %267 = vmatpush2.msra.mxu0 0.0
    %268 = vmatprep.subr.mxu0 0.0
    %269 = vmatpush2.msra.mxu0 0.0
    %270 = vmatprep.subr.mxu0 0.0
    %271 = vmatpush2.msra.mxu0 0.0
    %272 = vmatprep.subr.mxu0 0.0
    %273 = vmatpush2.msra.mxu0 0.0
    %274 = vmatprep.subr.mxu0 0.0
    %275 = vmatpush2.msra.mxu0 0.0
    %276 = vmatprep.subr.mxu0 0.0
    %277 = vmatpush2.msra.mxu0 0.0
    %278 = vmatprep.subr.mxu0 0.0
    %279 = vmatpush2.msra.mxu0 0.0
    %280 = vmatprep.subr.mxu0 0.0
    %281 = vmatpush2.msra.mxu0 0.0
    %282 = vmatprep.subr.mxu0 0.0
    %283 = vmatpush2.msra.mxu0 0.0
    %284 = vmatprep.mubr.f32.mxu0 0.0
    %285 = vmatmul.mubr.f32.gmra.mxu0 %v218
    %v286 = vpop.f32.mrf.mxu0
    %v287 = vadd.f32 %v216, %v286
    %v288 = vpop.f32.mrf.mxu0
    %289 = vdwg.mxu0
    %vm290 = vcmask 261120
    %v291 = vsel %vm290, %v287, 0.0
    %292 = vadd.xlane.f32.xlu0 %v291
    %v293 = vpop.xlane.xlu0 %292
    %v294 = vrcp.pop 32.0
    %v295 = vmul.f32 %v293, %v294
    %v296 = vmul.f32 %v287, %v287
    %v297 = vsel %vm290, %v296, 0.0
    %298 = vadd.xlane.f32.xlu0 %v297
    %v299 = vpop.xlane.xlu0 %298
    %v300 = vmul.f32 %v299, %v294
    %v301 = vmul.f32 %v295, %v295
    %v302 = vsub.f32 %v300, %v301
    %v303 = vsub.f32 %v287, %v295
    %v304 = vadd.f32 %v302, 1e-05
    %v305 = vrsqrt.pop %v304
    %v306 = vmul.f32 %v303, %v305
    %v307 = vlaneseq
    %v308 = vshrl.u32 %v307, 7
    %v309 = vsub.s32 0, %v308
    %v310 = vrot.slane %v37, %v309
    %v312 = vsel %vm290, %v306, 0
    %314 = vmatprep.subr.mxu0 0.0
    %315 = vmatpush1.msra.mxu0 0.0
    %316 = vmatprep.subr.mxu0 0.0
    %317 = vmatpush1.msra.mxu0 0.0
    %318 = vmatprep.subr.mxu0 0.0
    %319 = vmatpush1.msra.mxu0 0.0
    %320 = vmatprep.subr.mxu0 0.0
    %321 = vmatpush1.msra.mxu0 0.0
    %322 = vmatprep.subr.mxu0 0.0
    %323 = vmatpush1.msra.mxu0 0.0
    %324 = vmatprep.subr.mxu0 0.0
    %325 = vmatpush1.msra.mxu0 0.0
    %326 = vmatprep.subr.mxu0 0.0
    %327 = vmatpush1.msra.mxu0 0.0
    %328 = vmatprep.subr.mxu0 0.0
    %329 = vmatpush1.msra.mxu0 0.0
    %330 = vmatprep.subr.mxu0 0.0
    %331 = vmatpush1.msra.mxu0 0.0
    %332 = vmatprep.subr.mxu0 0.0
    %333 = vmatpush1.msra.mxu0 0.0
    %334 = vmatprep.subr.mxu0 0.0
    %335 = vmatpush1.msra.mxu0 0.0
    %336 = vmatprep.subr.mxu0 0.0
    %337 = vmatpush1.msra.mxu0 0.0
    %338 = vmatprep.subr.mxu0 0.0
    %339 = vmatpush1.msra.mxu0 %v33
    %340 = vmatprep.subr.mxu0 0.0
    %341 = vmatpush1.msra.mxu0 %v32
    %342 = vmatprep.subr.mxu0 0.0
    %343 = vmatpush1.msra.mxu0 %v31
    %344 = vmatprep.subr.mxu0 0.0
    %345 = vmatpush1.msra.mxu0 %v30
    %346 = vmatprep.subr.mxu0 0.0
    %347 = vmatpush2.msra.mxu0 0.0
    %348 = vmatprep.subr.mxu0 0.0
    %349 = vmatpush2.msra.mxu0 0.0
    %350 = vmatprep.subr.mxu0 0.0
    %351 = vmatpush2.msra.mxu0 0.0
    %352 = vmatprep.subr.mxu0 0.0
    %353 = vmatpush2.msra.mxu0 0.0
    %354 = vmatprep.subr.mxu0 0.0
    %355 = vmatpush2.msra.mxu0 0.0
    %356 = vmatprep.subr.mxu0 0.0
    %357 = vmatpush2.msra.mxu0 0.0
    %358 = vmatprep.subr.mxu0 0.0
    %359 = vmatpush2.msra.mxu0 0.0
    %360 = vmatprep.subr.mxu0 0.0
    %361 = vmatpush2.msra.mxu0 0.0
    %362 = vmatprep.subr.mxu0 0.0
    %363 = vmatpush2.msra.mxu0 0.0
    %364 = vmatprep.subr.mxu0 0.0
    %365 = vmatpush2.msra.mxu0 0.0
    %366 = vmatprep.subr.mxu0 0.0
    %367 = vmatpush2.msra.mxu0 0.0
    %368 = vmatprep.subr.mxu0 0.0
    %369 = vmatpush2.msra.mxu0 0.0
    %370 = vmatprep.subr.mxu0 0.0
    %371 = vmatpush2.msra.mxu0 0.0
    %372 = vmatprep.subr.mxu0 0.0
    %373 = vmatpush2.msra.mxu0 0.0
    %374 = vmatprep.subr.mxu0 0.0
    %375 = vmatpush2.msra.mxu0 0.0
    %376 = vmatprep.subr.mxu0 0.0
    %377 = vmatpush2.msra.mxu0 0.0
    %378 = vmatprep.mubr.f32.mxu0 0.0
    %379 = vmatmul.mubr.f32.gmra.mxu0 %v312
    %v380 = vpop.f32.mrf.mxu0
    %v381 = vadd.f32 %v310, %v380
    %v382 = vpop.f32.mrf.mxu0
    %383 = vdwg.mxu0
    %vm384 = vcmask 31744
    %385 = vst.msk [vmem:[%s2] sm:$0xff] %vm384, %v381
    // Predicated region
    $region14: #{custom_model_eva_forward.1} parent=1 // pred_check
      _
    $region15: #{custom_model_eva_forward.1} parent=1 // pred_check_branch
      %387 = sbr.rel (0) target = $region17
    $region16: #{custom_model_eva_forward.1} parent=1 // pred_region
      _
    $region17: #{custom_model_eva_forward.1} parent=1 // pred_fallthru
      _
    // Predicated region
    $region18: #{custom_model_eva_forward.1} parent=1 // pred_check
      _
    $region19: #{custom_model_eva_forward.1} parent=1 // pred_check_branch
      %389 = sbr.rel (0) target = $region21
    $region20: #{custom_model_eva_forward.1} parent=1 // pred_region
      _
    $region21: #{custom_model_eva_forward.1} parent=1 // pred_fallthru
      _
    %390 = vsyncpa [#allocation3], 1

</llo_original>
